<compile_context>
chip_gen: v7x
topology: tpu7x:2x2x1
jax: 0.10.0
libtpu: 0.0.40
codegen_flags: <defaults>
</compile_context>

<pallas_src>
import jax
import jax.numpy as jnp
from jax.experimental import pallas as pl
from jax.experimental.pallas import tpu as pltpu

NEG_SLOPE = 0.01  # torch.nn.LeakyReLU default


def _round_up(n, m):
    return ((n + m - 1) // m) * m


def _leaky_relu(x):
    # max(x, a*x) == LeakyReLU(x) for 0 < a < 1
    return jnp.maximum(x, NEG_SLOPE * x)


def _make_twinned_q_kernel(h2, out_pad, compute_dtype):
    """h2 = 2*hidden (fused hidden width), out_pad = padded fused output width."""

    def kernel(x_ref, w1_ref, w2_ref, w3_ref, b_ref, out_ref):
        x = x_ref[...].astype(compute_dtype)
        b1 = b_ref[0:1, :h2]
        b2 = b_ref[1:2, :h2]
        b3 = b_ref[2:3, :out_pad]

        h = jnp.dot(x, w1_ref[...], preferred_element_type=jnp.float32) + b1
        h = _leaky_relu(h)
        h = jnp.dot(h.astype(compute_dtype), w2_ref[...],
                    preferred_element_type=jnp.float32) + b2
        h = _leaky_relu(h)
        q = jnp.dot(h.astype(compute_dtype), w3_ref[...],
                    preferred_element_type=jnp.float32) + b3
        out_ref[...] = q.astype(out_ref.dtype)

    return kernel


def _pack_twin_params(params1, params2, out_pad, compute_dtype):
    """Fuse the two MLPs into 3 weight tensors + one bias table (host-side, once)."""
    w1a, b1a, w2a, b2a, w3a, b3a = params1
    w1b, b1b, w2b, b2b, w3b, b3b = params2
    h = w1a.shape[1]
    a = w3a.shape[1]
    h2 = 2 * h

    w1 = jnp.concatenate([w1a, w1b], axis=1).astype(compute_dtype)       # (in, 2H)
    w2 = jnp.zeros((h2, h2), jnp.float32)
    w2 = w2.at[:h, :h].set(w2a).at[h:, h:].set(w2b).astype(compute_dtype)  # blockdiag
    w3 = jnp.zeros((h2, out_pad), jnp.float32)
    w3 = w3.at[:h, :a].set(w3a).at[h:, a:2 * a].set(w3b).astype(compute_dtype)

    lmax = max(h2, out_pad)
    bias = jnp.zeros((3, lmax), jnp.float32)
    bias = bias.at[0, :h2].set(jnp.concatenate([b1a[0], b1b[0]]))
    bias = bias.at[1, :h2].set(jnp.concatenate([b2a[0], b2b[0]]))
    bias = bias.at[2, :2 * a].set(jnp.concatenate([b3a[0], b3b[0]]))
    return w1, w2, w3, bias


def twinned_q_forward(x, params1, params2, *, tile_b=256,
                      compute_dtype=jnp.float32):
    """x: (B, num_inputs). params*: (w1,b1,w2,b2,w3,b3) with weights as (in,out).

    Returns (q1, q2), each (B, num_actions), float32.
    compute_dtype=jnp.bfloat16 feeds the MXU bf16 operands (v6e/v7x perf mode);
    accumulation and elementwise math stay in f32.
    """
    B, num_inputs = x.shape
    hidden = params1[0].shape[1]
    num_actions = params1[4].shape[1]
    h2 = 2 * hidden
    out_pad = _round_up(max(2 * num_actions, 128), 128)  # lane-dense fused output

    w1, w2, w3, bias = _pack_twin_params(params1, params2, out_pad, compute_dtype)

    # batch tiling: >=8 (sublane), cap at tile_b, pad batch to a multiple.
    tile = max(8, min(tile_b, _round_up(B, 8)))
    b_pad = _round_up(B, tile)
    if b_pad != B:
        x = jnp.pad(x, ((0, b_pad - B), (0, 0)))
    grid = (b_pad // tile,)

    kernel = _make_twinned_q_kernel(h2, out_pad, compute_dtype)

    w_itemsize = jnp.dtype(compute_dtype).itemsize
    flops = 2 * b_pad * (num_inputs * h2 + h2 * h2 + h2 * out_pad)
    bytes_accessed = (b_pad * num_inputs * x.dtype.itemsize
                      + (w1.size + w2.size + w3.size) * w_itemsize
                      + bias.size * 4
                      + b_pad * out_pad * 4)

    out = pl.pallas_call(
        kernel,
        out_shape=jax.ShapeDtypeStruct((b_pad, out_pad), jnp.float32),
        grid_spec=pltpu.PrefetchScalarGridSpec(
            num_scalar_prefetch=0,
            grid=grid,
            in_specs=[
                pl.BlockSpec((tile, num_inputs), lambda i: (i, 0)),  # x tile
                pl.BlockSpec(w1.shape, lambda i: (0, 0)),            # resident
                pl.BlockSpec(w2.shape, lambda i: (0, 0)),            # resident
                pl.BlockSpec(w3.shape, lambda i: (0, 0)),            # resident
                pl.BlockSpec(bias.shape, lambda i: (0, 0)),          # resident
            ],
            out_specs=pl.BlockSpec((tile, out_pad), lambda i: (i, 0)),
        ),
        compiler_params=pltpu.CompilerParams(
            dimension_semantics=("parallel",),      # shard batch tiles across TCs
            vmem_limit_bytes=32 * 1024 * 1024,      # fits v7x's smaller VMEM too
        ),
        cost_estimate=pl.CostEstimate(
            flops=flops, transcendentals=0, bytes_accessed=bytes_accessed),
    )(x, w1, w2, w3, bias)

    q1 = out[:B, :num_actions]
    q2 = out[:B, num_actions:2 * num_actions]
    return q1, q2


def init_mlp_params(key, features):
    """Deterministic PyTorch-Linear-style init; weights returned as (in, out)."""
    params = []
    for fin, fout in zip(features[:-1], features[1:]):
        key, kw, kb = jax.random.split(key, 3)
        bound = 1.0 / jnp.sqrt(jnp.float32(fin))
        w = jax.random.uniform(kw, (fin, fout), jnp.float32, -bound, bound)
        b = jax.random.uniform(kb, (1, fout), jnp.float32, -bound, bound)
        params += [w, b]
    return tuple(params), key


def reference_forward(x, params):
    w1, b1, w2, b2, w3, b3 = params
    h = _leaky_relu(x @ w1 + b1)
    h = _leaky_relu(h @ w2 + b2)
    return h @ w3 + b3


if __name__ == "__main__":
    num_inputs = 32
    num_actions = 8
    batch = 8
    features = [num_inputs, 64, 64, num_actions]

    key = jax.random.PRNGKey(0)
    params1, key = init_mlp_params(key, features)
    params2, key = init_mlp_params(key, features)
    key, kx = jax.random.split(key)
    x = jax.random.normal(kx, (batch, num_inputs), jnp.float32)

    # f32 path (exact-ish vs reference)
    q1, q2 = twinned_q_forward(x, params1, params2)
    jax.block_until_ready((q1, q2))

    r1 = reference_forward(x, params1)
    r2 = reference_forward(x, params2)
    assert q1.shape == (batch, num_actions) and q2.shape == (batch, num_actions)
    assert jnp.allclose(q1, r1, atol=1e-4, rtol=1e-4)
    assert jnp.allclose(q2, r2, atol=1e-4, rtol=1e-4)

    # bf16-operand path (v6e/v7x perf mode) — looser tolerance, f32 accumulation
    q1b, q2b = twinned_q_forward(x, params1, params2, compute_dtype=jnp.bfloat16)
    jax.block_until_ready((q1b, q2b))
    assert jnp.allclose(q1b, r1, atol=1e-1, rtol=1e-1)
    assert jnp.allclose(q2b, r2, atol=1e-1, rtol=1e-1)

    print("KERNEL_OK")
</pallas_src>

<mosaic_0001>
module attributes {stable_mosaic.version = 11 : i64} {
  func.func @kernel(%arg0: i32, %arg1: memref<8x32xf32, #tpu.memory_space<vmem>>, %arg2: memref<32x128xf32, #tpu.memory_space<vmem>>, %arg3: memref<128x128xf32, #tpu.memory_space<vmem>>, %arg4: memref<128x128xf32, #tpu.memory_space<vmem>>, %arg5: memref<3x128xf32, #tpu.memory_space<vmem>>, %arg6: memref<8x128xf32, #tpu.memory_space<vmem>>) attributes {dimension_semantics = [#tpu.dimension_semantics<parallel>], iteration_bounds = array<i64: 1>, scalar_prefetch = 0 : i64, scratch_operands = 0 : i64, tpu.core_type = #tpu.core_type<tc>, window_params = [{transform_indices = @transform_0, window_bounds = array<i64: 8, 32>}, {pipeline_mode = #tpu.pipeline_mode<synchronous>, transform_indices = @transform_1, window_bounds = array<i64: 32, 128>}, {pipeline_mode = #tpu.pipeline_mode<synchronous>, transform_indices = @transform_2, window_bounds = array<i64: 128, 128>}, {pipeline_mode = #tpu.pipeline_mode<synchronous>, transform_indices = @transform_3, window_bounds = array<i64: 128, 128>}, {pipeline_mode = #tpu.pipeline_mode<synchronous>, transform_indices = @transform_4, window_bounds = array<i64: 3, 128>}, {transform_indices = @transform_5, window_bounds = array<i64: 8, 128>}]} {
    %c0 = arith.constant 0 : index
    %c0_0 = arith.constant 0 : index
    %0 = vector.load %arg1[%c0, %c0_0] : memref<8x32xf32, #tpu.memory_space<vmem>>, vector<8x32xf32>
    %c0_1 = arith.constant 0 : index
    %c0_2 = arith.constant 0 : index
    %1 = vector.load %arg5[%c0_1, %c0_2] : memref<3x128xf32, #tpu.memory_space<vmem>>, vector<1x128xf32>
    %c1 = arith.constant 1 : index
    %c0_3 = arith.constant 0 : index
    %2 = vector.load %arg5[%c1, %c0_3] : memref<3x128xf32, #tpu.memory_space<vmem>>, vector<1x128xf32>
    %c2 = arith.constant 2 : index
    %c0_4 = arith.constant 0 : index
    %3 = vector.load %arg5[%c2, %c0_4] : memref<3x128xf32, #tpu.memory_space<vmem>>, vector<1x128xf32>
    %c0_5 = arith.constant 0 : index
    %c0_6 = arith.constant 0 : index
    %4 = vector.load %arg2[%c0_5, %c0_6] : memref<32x128xf32, #tpu.memory_space<vmem>>, vector<32x128xf32>
    %cst = arith.constant dense<0.000000e+00> : vector<8x128xf32>
    %5 = tpu.matmul %0, %4, %cst {dimension_numbers = #tpu.dot_dimension_numbers<[1], [0], [0], [1], [0, 0, 1, 1], [], []>} : vector<8x32xf32>, vector<32x128xf32>, vector<8x128xf32> -> vector<8x128xf32>
    %6 = vector.broadcast %1 : vector<1x128xf32> to vector<8x128xf32>
    %7 = arith.addf %5, %6 : vector<8x128xf32>
    %cst_7 = arith.constant 0.00999999977 : f32
    %8 = vector.broadcast %cst_7 : f32 to vector<8x128xf32>
    %9 = arith.mulf %8, %7 : vector<8x128xf32>
    %10 = arith.maximumf %7, %9 : vector<8x128xf32>
    %c0_8 = arith.constant 0 : index
    %c0_9 = arith.constant 0 : index
    %11 = vector.load %arg3[%c0_8, %c0_9] : memref<128x128xf32, #tpu.memory_space<vmem>>, vector<128x128xf32>
    %cst_10 = arith.constant dense<0.000000e+00> : vector<8x128xf32>
    %12 = tpu.matmul %10, %11, %cst_10 {dimension_numbers = #tpu.dot_dimension_numbers<[1], [0], [0], [1], [0, 0, 1, 1], [], []>} : vector<8x128xf32>, vector<128x128xf32>, vector<8x128xf32> -> vector<8x128xf32>
    %13 = vector.broadcast %2 : vector<1x128xf32> to vector<8x128xf32>
    %14 = arith.addf %12, %13 : vector<8x128xf32>
    %cst_11 = arith.constant 0.00999999977 : f32
    %15 = vector.broadcast %cst_11 : f32 to vector<8x128xf32>
    %16 = arith.mulf %15, %14 : vector<8x128xf32>
    %17 = arith.maximumf %14, %16 : vector<8x128xf32>
    %c0_12 = arith.constant 0 : index
    %c0_13 = arith.constant 0 : index
    %18 = vector.load %arg4[%c0_12, %c0_13] : memref<128x128xf32, #tpu.memory_space<vmem>>, vector<128x128xf32>
    %cst_14 = arith.constant dense<0.000000e+00> : vector<8x128xf32>
    %19 = tpu.matmul %17, %18, %cst_14 {dimension_numbers = #tpu.dot_dimension_numbers<[1], [0], [0], [1], [0, 0, 1, 1], [], []>} : vector<8x128xf32>, vector<128x128xf32>, vector<8x128xf32> -> vector<8x128xf32>
    %20 = vector.broadcast %3 : vector<1x128xf32> to vector<8x128xf32>
    %21 = arith.addf %19, %20 : vector<8x128xf32>
    %c0_15 = arith.constant 0 : index
    %c0_16 = arith.constant 0 : index
    %22 = vector.load %arg6[%c0_15, %c0_16] : memref<8x128xf32, #tpu.memory_space<vmem>>, vector<8x128xf32>
    tpu.vector_store %arg6[%c0_15, %c0_16], %21 {strides = array<i32>} : memref<8x128xf32, #tpu.memory_space<vmem>>, vector<8x128xf32>,
    return
  }
  func.func @transform_0(%arg0: i32) -> (i32, i32) {
    %c0_i32 = arith.constant 0 : i32
    %c0_i32_0 = arith.constant 0 : i32
    return %arg0, %c0_i32 : i32, i32
  }
  func.func @transform_1(%arg0: i32) -> (i32, i32) {
    %c0_i32 = arith.constant 0 : i32
    %c0_i32_0 = arith.constant 0 : i32
    %c0_i32_1 = arith.constant 0 : i32
    return %c0_i32, %c0_i32_0 : i32, i32
  }
  func.func @transform_2(%arg0: i32) -> (i32, i32) {
    %c0_i32 = arith.constant 0 : i32
    %c0_i32_0 = arith.constant 0 : i32
    %c0_i32_1 = arith.constant 0 : i32
    return %c0_i32, %c0_i32_0 : i32, i32
  }
  func.func @transform_3(%arg0: i32) -> (i32, i32) {
    %c0_i32 = arith.constant 0 : i32
    %c0_i32_0 = arith.constant 0 : i32
    %c0_i32_1 = arith.constant 0 : i32
    return %c0_i32, %c0_i32_0 : i32, i32
  }
  func.func @transform_4(%arg0: i32) -> (i32, i32) {
    %c0_i32 = arith.constant 0 : i32
    %c0_i32_0 = arith.constant 0 : i32
    %c0_i32_1 = arith.constant 0 : i32
    return %c0_i32, %c0_i32_0 : i32, i32
  }
  func.func @transform_5(%arg0: i32) -> (i32, i32) {
    %c0_i32 = arith.constant 0 : i32
    %c0_i32_0 = arith.constant 0 : i32
    return %arg0, %c0_i32 : i32, i32
  }
}

</mosaic_0001>

<llo_original>
// kernel: tpu_custom_call.1
$region0: #{tpu_custom_call.1}
  #allocation0 [shape = 'u32[]', space=smem, size = 0x4, offset = 0x4, fixed_abs, tag = 'smem constant byte address 0x4 - core index']
  #allocation1 [shape = 'u32[144,128]{1,0:T(1,128)}', space=vmem, size = 0x12000, scoped, tag = 'internal scratch']
  %s0 = inlined_call_operand.hbm [shape: f32[8,32], index: 0, kind: input, shape index: {}]
  %s1 = inlined_call_operand.hbm [shape: f32[32,128], index: 1, kind: input, shape index: {}]
  %s2 = inlined_call_operand.hbm [shape: f32[128,128], index: 2, kind: input, shape index: {}]
  %s3 = inlined_call_operand.hbm [shape: f32[128,128], index: 3, kind: input, shape index: {}]
  %s4 = inlined_call_operand.vmem [shape: f32[3,128], index: 4, kind: input, shape index: {}]
  %s5 = inlined_call_operand.hbm [shape: f32[8,128], index: 5, kind: output, shape index: {}]
  %s6 = sld [smem:[#allocation0]]
  $region46: #{tpu_custom_call.1} parent=0
    _
  %s8 = ssub.s32 1, %s6
  %s9 = scalar_select 0, %s8, %s6
  $region1: #{tpu_custom_call.1} parent=0
    #allocation2 [shape = 'u8[4096]{0}', space=vmem, size = 0x1000, scoped, tag = 'input window, operand 0, single buffered']
    #allocation3 [shape = 's32[1]{0}', space=sflag, size = 0x4, scoped, tag = 'scoped memory for tpu_custom_call.1']
    #allocation4 [shape = 's32[1]{0}', space=sflag, size = 0x4, scoped, tag = 'scoped memory for tpu_custom_call.1']
    #allocation5 [shape = 'u8[16384]{0}', space=vmem, size = 0x4000, scoped, tag = 'input window, operand 1, single buffered']
    #allocation6 [shape = 's32[1]{0}', space=sflag, size = 0x4, scoped, tag = 'scoped memory for tpu_custom_call.1']
    #allocation7 [shape = 'u8[65536]{0}', space=vmem, size = 0x10000, scoped, tag = 'input window, operand 2, single buffered']
    #allocation8 [shape = 'u8[65536]{0}', space=vmem, size = 0x10000, scoped, tag = 'input window, operand 3, single buffered']
    #allocation9 [shape = 's32[1]{0}', space=sflag, size = 0x4, scoped, tag = 'scoped memory for tpu_custom_call.1']
    #allocation10 [shape = 'u8[4096]{0}', space=vmem, size = 0x1000, scoped, tag = 'output window, operand 0, single buffered']
    %10 = vsyncpa [#allocation3], 0
    %11 = vsyncpa [#allocation6], 0
    %12 = vsyncpa [#allocation9], 0
    %13 = vsyncpa [#allocation4], 0
    // Predicated region
    $region2: #{tpu_custom_call.1} parent=1 // pred_check
      _
    $region3: #{tpu_custom_call.1} parent=1 // pred_check_branch
      %15 = sbr.rel (0) target = $region5
    $region4: #{tpu_custom_call.1} parent=1 // pred_region
      %s17 = ssub.s32 128, 128
      %18 = vsyncadd [#allocation3], %s17
      %s20 = sshll.u32 [#allocation2], 4
      %s21 = int_to_ptr.vmem [resolvable:$true] %s20
      %23 = dma.hbm_to_vmem [thread:$0]  %s0, 128, %s21, [#allocation3]
    $region5: #{tpu_custom_call.1} parent=1 // pred_fallthru
      _
    // Predicated region
    $region6: #{tpu_custom_call.1} parent=1 // pred_check
      _
    $region7: #{tpu_custom_call.1} parent=1 // pred_check_branch
      %25 = sbr.rel (0) target = $region9
    $region8: #{tpu_custom_call.1} parent=1 // pred_region
      %s27 = ssub.s32 512, 512
      %28 = vsyncadd [#allocation6], %s27
      %s29 = sshll.u32 [#allocation5], 4
      %s30 = int_to_ptr.vmem [resolvable:$true] %s29
      %35 = dma.hbm_to_vmem [thread:$0]  %s1, 512, %s30, [#allocation6], 128, 128, 8
    $region9: #{tpu_custom_call.1} parent=1 // pred_fallthru
      _
    // Predicated region
    $region10: #{tpu_custom_call.1} parent=1 // pred_check
      _
    $region11: #{tpu_custom_call.1} parent=1 // pred_check_branch
      %37 = sbr.rel (0) target = $region13
    $region12: #{tpu_custom_call.1} parent=1 // pred_region
      %s39 = ssub.s32 2048, 2048
      %40 = vsyncadd [#allocation6], %s39
      %s41 = sshll.u32 [#allocation7], 4
      %s42 = int_to_ptr.vmem [resolvable:$true] %s41
      %47 = dma.hbm_to_vmem [thread:$0]  %s2, 2048, %s42, [#allocation6], 128, 128, 8
    $region13: #{tpu_custom_call.1} parent=1 // pred_fallthru
      _
    // Predicated region
    $region14: #{tpu_custom_call.1} parent=1 // pred_check
      _
    $region15: #{tpu_custom_call.1} parent=1 // pred_check_branch
      %49 = sbr.rel (0) target = $region17
    $region16: #{tpu_custom_call.1} parent=1 // pred_region
      %s51 = ssub.s32 2048, 2048
      %52 = vsyncadd [#allocation9], %s51
      %s53 = sshll.u32 [#allocation8], 4
      %s54 = int_to_ptr.vmem [resolvable:$true] %s53
      %59 = dma.hbm_to_vmem [thread:$0]  %s3, 2048, %s54, [#allocation9], 128, 128, 8
    $region17: #{tpu_custom_call.1} parent=1 // pred_fallthru
      _
    // Predicated region
    $region18: #{tpu_custom_call.1} parent=1 // pred_check
      _
    $region19: #{tpu_custom_call.1} parent=1 // pred_check_branch
      %61 = sbr.rel (0) target = $region21
    $region20: #{tpu_custom_call.1} parent=1 // pred_region
      _
    $region21: #{tpu_custom_call.1} parent=1 // pred_fallthru
      _
    // Predicated region
    $region22: #{tpu_custom_call.1} parent=1 // pred_check
      _
    $region23: #{tpu_custom_call.1} parent=1 // pred_check_branch
      %63 = sbr.rel (0) target = $region25
    $region24: #{tpu_custom_call.1} parent=1 // pred_region
      %64 = dma.done [#allocation3], 128
    $region25: #{tpu_custom_call.1} parent=1 // pred_fallthru
      _
    // Predicated region
    $region26: #{tpu_custom_call.1} parent=1 // pred_check
      _
    $region27: #{tpu_custom_call.1} parent=1 // pred_check_branch
      %66 = sbr.rel (0) target = $region29
    $region28: #{tpu_custom_call.1} parent=1 // pred_region
      %67 = dma.done [#allocation6], 512
    $region29: #{tpu_custom_call.1} parent=1 // pred_fallthru
      _
    // Predicated region
    $region30: #{tpu_custom_call.1} parent=1 // pred_check
      _
    $region31: #{tpu_custom_call.1} parent=1 // pred_check_branch
      %69 = sbr.rel (0) target = $region33
    $region32: #{tpu_custom_call.1} parent=1 // pred_region
      %70 = dma.done [#allocation6], 2048
    $region33: #{tpu_custom_call.1} parent=1 // pred_fallthru
      _
    // Predicated region
    $region34: #{tpu_custom_call.1} parent=1 // pred_check
      _
    $region35: #{tpu_custom_call.1} parent=1 // pred_check_branch
      %72 = sbr.rel (0) target = $region37
    $region36: #{tpu_custom_call.1} parent=1 // pred_region
      %73 = dma.done [#allocation9], 2048
    $region37: #{tpu_custom_call.1} parent=1 // pred_fallthru
      _
    %v74 = vld [vmem:[#allocation2] sm:$0xff]
    %v75 = vld [vmem:[%s4] sm:$0x1]
    %v76 = vld [vmem:[%s4 + $0x1] sm:$0x1]
    %v77 = vld [vmem:[%s4 + $0x2] sm:$0x1]
    %v78 = vld [vmem:[#allocation5] sm:$0xff]
    %v79 = vld [vmem:[#allocation5 + $0x8] sm:$0xff]
    %v80 = vld [vmem:[#allocation5 + $0x10] sm:$0xff]
    %v81 = vld [vmem:[#allocation5 + $0x18] sm:$0xff]
    %v82 = vlaneseq
    %v83 = vshrl.u32 %v82, 7
    %v84 = vsub.s32 0, %v83
    %v85 = vrot.slane %v75, %v84
    %vm86 = vcmask 261120
    %v88 = vsel %vm86, %v74, 0
    %90 = vmatprep.subr.mxu0 0.0
    %91 = vmatpush1.msra.mxu0 %v78
    %92 = vmatprep.subr.mxu0 0.0
    %93 = vmatpush1.msra.mxu0 %v79
    %94 = vmatprep.subr.mxu0 0.0
    %95 = vmatpush1.msra.mxu0 %v80
    %96 = vmatprep.subr.mxu0 0.0
    %97 = vmatpush1.msra.mxu0 %v81
    %98 = vmatprep.subr.mxu0 0.0
    %99 = vmatpush1.msra.mxu0 0.0
    %100 = vmatprep.subr.mxu0 0.0
    %101 = vmatpush1.msra.mxu0 0.0
    %102 = vmatprep.subr.mxu0 0.0
    %103 = vmatpush1.msra.mxu0 0.0
    %104 = vmatprep.subr.mxu0 0.0
    %105 = vmatpush1.msra.mxu0 0.0
    %106 = vmatprep.subr.mxu0 0.0
    %107 = vmatpush1.msra.mxu0 0.0
    %108 = vmatprep.subr.mxu0 0.0
    %109 = vmatpush1.msra.mxu0 0.0
    %110 = vmatprep.subr.mxu0 0.0
    %111 = vmatpush1.msra.mxu0 0.0
    %112 = vmatprep.subr.mxu0 0.0
    %113 = vmatpush1.msra.mxu0 0.0
    %114 = vmatprep.subr.mxu0 0.0
    %115 = vmatpush1.msra.mxu0 0.0
    %116 = vmatprep.subr.mxu0 0.0
    %117 = vmatpush1.msra.mxu0 0.0
    %118 = vmatprep.subr.mxu0 0.0
    %119 = vmatpush1.msra.mxu0 0.0
    %120 = vmatprep.subr.mxu0 0.0
    %121 = vmatpush1.msra.mxu0 0.0
    %122 = vmatprep.subr.mxu0 0.0
    %123 = vmatpush1.msra.mxu0 0.0
    %124 = vmatprep.subr.mxu0 0.0
    %125 = vmatpush1.msra.mxu0 0.0
    %126 = vmatprep.subr.mxu0 0.0
    %127 = vmatpush1.msra.mxu0 0.0
    %128 = vmatprep.subr.mxu0 0.0
    %129 = vmatpush1.msra.mxu0 0.0
    %130 = vmatprep.subr.mxu0 0.0
    %131 = vmatpush1.msra.mxu0 0.0
    %132 = vmatprep.subr.mxu0 0.0
    %133 = vmatpush1.msra.mxu0 0.0
    %134 = vmatprep.subr.mxu0 0.0
    %135 = vmatpush1.msra.mxu0 0.0
    %136 = vmatprep.subr.mxu0 0.0
    %137 = vmatpush1.msra.mxu0 0.0
    %138 = vmatprep.subr.mxu0 0.0
    %139 = vmatpush1.msra.mxu0 0.0
    %140 = vmatprep.subr.mxu0 0.0
    %141 = vmatpush1.msra.mxu0 0.0
    %142 = vmatprep.subr.mxu0 0.0
    %143 = vmatpush1.msra.mxu0 0.0
    %144 = vmatprep.subr.mxu0 0.0
    %145 = vmatpush1.msra.mxu0 0.0
    %146 = vmatprep.subr.mxu0 0.0
    %147 = vmatpush1.msra.mxu0 0.0
    %148 = vmatprep.subr.mxu0 0.0
    %149 = vmatpush1.msra.mxu0 0.0
    %150 = vmatprep.subr.mxu0 0.0
    %151 = vmatpush1.msra.mxu0 0.0
    %152 = vmatprep.subr.mxu0 0.0
    %153 = vmatpush1.msra.mxu0 0.0
    %154 = vmatprep.mubr.f32.mxu0 0.0
    %155 = vmatmul.mubr.f32.gmra.mrb[0].mxu0 %v88
    %v156 = vpop.f32.mrb[0].mxu0
    %v157 = vadd.f32 %v85, %v156
    %v158 = vpop.f32.mrb[0].mxu0
    %159 = vdwg.mxu0
    %v160 = vmul.f32 %v157, 0.01
    %v161 = vmax.f32 %v157, %v160
    %v162 = vld [vmem:[#allocation7] sm:$0xff]
    %v163 = vld [vmem:[#allocation7 + $0x8] sm:$0xff]
    %v164 = vld [vmem:[#allocation7 + $0x10] sm:$0xff]
    %v165 = vld [vmem:[#allocation7 + $0x18] sm:$0xff]
    %v166 = vld [vmem:[#allocation7 + $0x20] sm:$0xff]
    %v167 = vld [vmem:[#allocation7 + $0x28] sm:$0xff]
    %v168 = vld [vmem:[#allocation7 + $0x30] sm:$0xff]
    %v169 = vld [vmem:[#allocation7 + $0x38] sm:$0xff]
    %v170 = vld [vmem:[#allocation7 + $0x40] sm:$0xff]
    %v171 = vld [vmem:[#allocation7 + $0x48] sm:$0xff]
    %v172 = vld [vmem:[#allocation7 + $0x50] sm:$0xff]
    %v173 = vld [vmem:[#allocation7 + $0x58] sm:$0xff]
    %v174 = vld [vmem:[#allocation7 + $0x60] sm:$0xff]
    %v175 = vld [vmem:[#allocation7 + $0x68] sm:$0xff]
    %v176 = vld [vmem:[#allocation7 + $0x70] sm:$0xff]
    %v177 = vld [vmem:[#allocation7 + $0x78] sm:$0xff]
    %v178 = vlaneseq
    %v179 = vshrl.u32 %v178, 7
    %v180 = vsub.s32 0, %v179
    %v181 = vrot.slane %v76, %v180
    %182 = vmatprep.subr.mxu0 0.0
    %183 = vmatpush1.msra.mxu0 %v162
    %184 = vmatprep.subr.mxu0 0.0
    %185 = vmatpush1.msra.mxu0 %v163
    %186 = vmatprep.subr.mxu0 0.0
    %187 = vmatpush1.msra.mxu0 %v164
    %188 = vmatprep.subr.mxu0 0.0
    %189 = vmatpush1.msra.mxu0 %v165
    %190 = vmatprep.subr.mxu0 0.0
    %191 = vmatpush1.msra.mxu0 %v166
    %192 = vmatprep.subr.mxu0 0.0
    %193 = vmatpush1.msra.mxu0 %v167
    %194 = vmatprep.subr.mxu0 0.0
    %195 = vmatpush1.msra.mxu0 %v168
    %196 = vmatprep.subr.mxu0 0.0
    %197 = vmatpush1.msra.mxu0 %v169
    %198 = vmatprep.subr.mxu0 0.0
    %199 = vmatpush1.msra.mxu0 %v170
    %200 = vmatprep.subr.mxu0 0.0
    %201 = vmatpush1.msra.mxu0 %v171
    %202 = vmatprep.subr.mxu0 0.0
    %203 = vmatpush1.msra.mxu0 %v172
    %204 = vmatprep.subr.mxu0 0.0
    %205 = vmatpush1.msra.mxu0 %v173
    %206 = vmatprep.subr.mxu0 0.0
    %207 = vmatpush1.msra.mxu0 %v174
    %208 = vmatprep.subr.mxu0 0.0
    %209 = vmatpush1.msra.mxu0 %v175
    %210 = vmatprep.subr.mxu0 0.0
    %211 = vmatpush1.msra.mxu0 %v176
    %212 = vmatprep.subr.mxu0 0.0
    %213 = vmatpush1.msra.mxu0 %v177
    %214 = vmatprep.subr.mxu0 0.0
    %215 = vmatpush1.msra.mxu0 0.0
    %216 = vmatprep.subr.mxu0 0.0
    %217 = vmatpush1.msra.mxu0 0.0
    %218 = vmatprep.subr.mxu0 0.0
    %219 = vmatpush1.msra.mxu0 0.0
    %220 = vmatprep.subr.mxu0 0.0
    %221 = vmatpush1.msra.mxu0 0.0
    %222 = vmatprep.subr.mxu0 0.0
    %223 = vmatpush1.msra.mxu0 0.0
    %224 = vmatprep.subr.mxu0 0.0
    %225 = vmatpush1.msra.mxu0 0.0
    %226 = vmatprep.subr.mxu0 0.0
    %227 = vmatpush1.msra.mxu0 0.0
    %228 = vmatprep.subr.mxu0 0.0
    %229 = vmatpush1.msra.mxu0 0.0
    %230 = vmatprep.subr.mxu0 0.0
    %231 = vmatpush1.msra.mxu0 0.0
    %232 = vmatprep.subr.mxu0 0.0
    %233 = vmatpush1.msra.mxu0 0.0
    %234 = vmatprep.subr.mxu0 0.0
    %235 = vmatpush1.msra.mxu0 0.0
    %236 = vmatprep.subr.mxu0 0.0
    %237 = vmatpush1.msra.mxu0 0.0
    %238 = vmatprep.subr.mxu0 0.0
    %239 = vmatpush1.msra.mxu0 0.0
    %240 = vmatprep.subr.mxu0 0.0
    %241 = vmatpush1.msra.mxu0 0.0
    %242 = vmatprep.subr.mxu0 0.0
    %243 = vmatpush1.msra.mxu0 0.0
    %244 = vmatprep.subr.mxu0 0.0
    %245 = vmatpush1.msra.mxu0 0.0
    %246 = vmatprep.mubr.f32.mxu0 0.0
    %247 = vmatmul.mubr.f32.gmra.mrb[0].mxu0 %v161
    %v248 = vpop.f32.mrb[0].mxu0
    %v249 = vadd.f32 %v181, %v248
    %v250 = vpop.f32.mrb[0].mxu0
    %251 = vdwg.mxu0
    %v252 = vmul.f32 %v249, 0.01
    %v253 = vmax.f32 %v249, %v252
    %v254 = vld [vmem:[#allocation8] sm:$0xff]
    %v255 = vld [vmem:[#allocation8 + $0x8] sm:$0xff]
    %v256 = vld [vmem:[#allocation8 + $0x10] sm:$0xff]
    %v257 = vld [vmem:[#allocation8 + $0x18] sm:$0xff]
    %v258 = vld [vmem:[#allocation8 + $0x20] sm:$0xff]
    %v259 = vld [vmem:[#allocation8 + $0x28] sm:$0xff]
    %v260 = vld [vmem:[#allocation8 + $0x30] sm:$0xff]
    %v261 = vld [vmem:[#allocation8 + $0x38] sm:$0xff]
    %v262 = vld [vmem:[#allocation8 + $0x40] sm:$0xff]
    %v263 = vld [vmem:[#allocation8 + $0x48] sm:$0xff]
    %v264 = vld [vmem:[#allocation8 + $0x50] sm:$0xff]
    %v265 = vld [vmem:[#allocation8 + $0x58] sm:$0xff]
    %v266 = vld [vmem:[#allocation8 + $0x60] sm:$0xff]
    %v267 = vld [vmem:[#allocation8 + $0x68] sm:$0xff]
    %v268 = vld [vmem:[#allocation8 + $0x70] sm:$0xff]
    %v269 = vld [vmem:[#allocation8 + $0x78] sm:$0xff]
    %v270 = vlaneseq
    %v271 = vshrl.u32 %v270, 7
    %v272 = vsub.s32 0, %v271
    %v273 = vrot.slane %v77, %v272
    %274 = vmatprep.subr.mxu0 0.0
    %275 = vmatpush1.msra.mxu0 %v254
    %276 = vmatprep.subr.mxu0 0.0
    %277 = vmatpush1.msra.mxu0 %v255
    %278 = vmatprep.subr.mxu0 0.0
    %279 = vmatpush1.msra.mxu0 %v256
    %280 = vmatprep.subr.mxu0 0.0
    %281 = vmatpush1.msra.mxu0 %v257
    %282 = vmatprep.subr.mxu0 0.0
    %283 = vmatpush1.msra.mxu0 %v258
    %284 = vmatprep.subr.mxu0 0.0
    %285 = vmatpush1.msra.mxu0 %v259
    %286 = vmatprep.subr.mxu0 0.0
    %287 = vmatpush1.msra.mxu0 %v260
    %288 = vmatprep.subr.mxu0 0.0
    %289 = vmatpush1.msra.mxu0 %v261
    %290 = vmatprep.subr.mxu0 0.0
    %291 = vmatpush1.msra.mxu0 %v262
    %292 = vmatprep.subr.mxu0 0.0
    %293 = vmatpush1.msra.mxu0 %v263
    %294 = vmatprep.subr.mxu0 0.0
    %295 = vmatpush1.msra.mxu0 %v264
    %296 = vmatprep.subr.mxu0 0.0
    %297 = vmatpush1.msra.mxu0 %v265
    %298 = vmatprep.subr.mxu0 0.0
    %299 = vmatpush1.msra.mxu0 %v266
    %300 = vmatprep.subr.mxu0 0.0
    %301 = vmatpush1.msra.mxu0 %v267
    %302 = vmatprep.subr.mxu0 0.0
    %303 = vmatpush1.msra.mxu0 %v268
    %304 = vmatprep.subr.mxu0 0.0
    %305 = vmatpush1.msra.mxu0 %v269
    %306 = vmatprep.subr.mxu0 0.0
    %307 = vmatpush1.msra.mxu0 0.0
    %308 = vmatprep.subr.mxu0 0.0
    %309 = vmatpush1.msra.mxu0 0.0
    %310 = vmatprep.subr.mxu0 0.0
    %311 = vmatpush1.msra.mxu0 0.0
    %312 = vmatprep.subr.mxu0 0.0
    %313 = vmatpush1.msra.mxu0 0.0
    %314 = vmatprep.subr.mxu0 0.0
    %315 = vmatpush1.msra.mxu0 0.0
    %316 = vmatprep.subr.mxu0 0.0
    %317 = vmatpush1.msra.mxu0 0.0
    %318 = vmatprep.subr.mxu0 0.0
    %319 = vmatpush1.msra.mxu0 0.0
    %320 = vmatprep.subr.mxu0 0.0
    %321 = vmatpush1.msra.mxu0 0.0
    %322 = vmatprep.subr.mxu0 0.0
    %323 = vmatpush1.msra.mxu0 0.0
    %324 = vmatprep.subr.mxu0 0.0
    %325 = vmatpush1.msra.mxu0 0.0
    %326 = vmatprep.subr.mxu0 0.0
    %327 = vmatpush1.msra.mxu0 0.0
    %328 = vmatprep.subr.mxu0 0.0
    %329 = vmatpush1.msra.mxu0 0.0
    %330 = vmatprep.subr.mxu0 0.0
    %331 = vmatpush1.msra.mxu0 0.0
    %332 = vmatprep.subr.mxu0 0.0
    %333 = vmatpush1.msra.mxu0 0.0
    %334 = vmatprep.subr.mxu0 0.0
    %335 = vmatpush1.msra.mxu0 0.0
    %336 = vmatprep.subr.mxu0 0.0
    %337 = vmatpush1.msra.mxu0 0.0
    %338 = vmatprep.mubr.f32.mxu0 0.0
    %339 = vmatmul.mubr.f32.gmra.mrb[0].mxu0 %v253
    %v340 = vpop.f32.mrb[0].mxu0
    %v341 = vadd.f32 %v273, %v340
    %v342 = vpop.f32.mrb[0].mxu0
    %343 = vdwg.mxu0
    %344 = vst [vmem:[#allocation10] sm:$0xff] %v341
    // Predicated region
    $region38: #{tpu_custom_call.1} parent=1 // pred_check
      _
    $region39: #{tpu_custom_call.1} parent=1 // pred_check_branch
      %346 = sbr.rel (0) target = $region41
    $region40: #{tpu_custom_call.1} parent=1 // pred_region
      %s348 = ssub.s32 128, 128
      %349 = vsyncadd [#allocation4], %s348
      %s351 = sshll.u32 [#allocation10], 4
      %s352 = int_to_ptr.vmem [resolvable:$true] %s351
      %354 = dma.vmem_to_hbm [thread:$0]  %s352, 128, %s5, [#allocation4]
    $region41: #{tpu_custom_call.1} parent=1 // pred_fallthru
      _
    // Predicated region
    $region42: #{tpu_custom_call.1} parent=1 // pred_check
      _
    $region43: #{tpu_custom_call.1} parent=1 // pred_check_branch
      %356 = sbr.rel (0) target = $region45
    $region44: #{tpu_custom_call.1} parent=1 // pred_region
      %357 = dma.done [#allocation4], 128
    $region45: #{tpu_custom_call.1} parent=1 // pred_fallthru
      _
    %358 = vsyncpa [#allocation3], 1
    %359 = vsyncpa [#allocation6], 1
    %360 = vsyncpa [#allocation9], 1
    %361 = vsyncpa [#allocation4], 1

</llo_original>
